<compile_context>
chip_gen: v6e
topology: v6e:2x2x1
jax: 0.10.0
libtpu: 0.0.40
codegen_flags: <defaults>
</compile_context>

<pallas_src>
import jax
import jax.numpy as jnp
from jax.experimental import pallas as pl
from jax.experimental.pallas import tpu as pltpu


def _round_up(x, m):
    return ((x + m - 1) // m) * m


def _cdiv(a, b):
    return (a + b - 1) // b


def _pad2(x, rows, cols, value=0.0):
    pr, pc = rows - x.shape[0], cols - x.shape[1]
    if pr == 0 and pc == 0:
        return x
    return jnp.pad(x, ((0, pr), (0, pc)), constant_values=value)


def _vmem_capacity_bytes():
    try:
        return int(pltpu.get_tpu_info().vmem_capacity_bytes)
    except Exception:
        return 64 << 20  # conservative fallback (v7x per-TC VMEM)


def _mma_kernel(a_ref, m_ref, wq_ref, bq_ref, wk_ref, bk_ref, o_ref):
    a = a_ref[...]                      # (TB, Dp), activation dtype
    m = m_ref[...]

    # Linear layers on the MXU: activation-dtype operands, f32 accumulation.
    q = jnp.dot(a, wq_ref[...], preferred_element_type=jnp.float32) + bq_ref[...]
    k = jnp.dot(m, wk_ref[...], preferred_element_type=jnp.float32) + bk_ref[...]

    # einsum('bn,bn->bn') == elementwise product; softmax over the feature dim.
    # Padded lanes carry bq=-1e15 / bk=+1e15, so s_pad = -1e30 and exp() == 0:
    # the pad mask is folded into the biases (no iota/where in-kernel).
    s = q * k
    s = s - jnp.max(s, axis=1, keepdims=True)
    e = jnp.exp(s)
    attn = e * pl.reciprocal(jnp.sum(e, axis=1, keepdims=True), approx=True)

    # attn*a + (1-attn)*m == m + attn*(a - m); keep few live (TB, Dp) f32 temps
    # and write the cast result straight to the output ref.
    m32 = m.astype(jnp.float32)
    diff = a.astype(jnp.float32) - m32
    o_ref[...] = (m32 + attn * diff).astype(o_ref.dtype)


def prepare_params(params, d, activation_dtype):
    """One-time weight preprocessing (hoisted out of the per-call hot path).

    nn.Linear weights are (out, in); pre-transpose to (in, out), zero-pad to a
    lane-dense (Dp, Dp), and keep them in the ACTIVATION dtype so the MXU runs
    its native path (f32 accumulation happens in the kernel). Biases stay f32;
    their padded lanes encode the softmax mask (bq_pad * bk_pad = -1e30).
    The dead "value" Linear (wv, bv) is intentionally not used.
    """
    dp = _round_up(d, 128)
    wq_t = _pad2(jnp.asarray(params["wq"]).T.astype(activation_dtype), dp, dp)
    wk_t = _pad2(jnp.asarray(params["wk"]).T.astype(activation_dtype), dp, dp)
    bq = _pad2(jnp.asarray(params["bq"], jnp.float32).reshape(1, -1), 1, dp,
               value=-1e15)
    bk = _pad2(jnp.asarray(params["bk"], jnp.float32).reshape(1, -1), 1, dp,
               value=1e15)
    return {"wq_t": wq_t, "bq": bq, "wk_t": wk_t, "bk": bk, "d": d, "dp": dp}


def multimodal_attention(audio, mel, prepared, *, tb=None):
    """audio: (B, D), mel: (B, D); the module's blend requires audio_dim == mel_dim."""
    B, D = audio.shape
    assert mel.shape == (B, D), "blend requires audio_dim == mel_dim"
    assert prepared["d"] == D
    Dp = prepared["dp"]

    abytes = jnp.dtype(audio.dtype).itemsize
    wbytes = jnp.dtype(prepared["wq_t"].dtype).itemsize
    vmem_cap = _vmem_capacity_bytes()
    is_v7x = vmem_cap <= (72 << 20)

    if tb is None:
        # Bigger tiles on v7x for small feature dims (per-step overhead is a
        # larger fraction of each step at 3.2 TB/s HBM); 512 elsewhere.
        tb = 1024 if (is_v7x and Dp <= 512) else 512

    # Batch tiling: minimize padding, and use >= 2 (even) grid steps when the
    # batch allows so a ("parallel",) grid spreads across both v7x TensorCores.
    b8 = _round_up(B, 8)
    n_tiles = max(_cdiv(b8, tb), 1)
    if b8 >= 16:
        n_tiles = max(n_tiles, 2)
        if n_tiles % 2:
            n_tiles += 1
    TB = _round_up(_cdiv(b8, n_tiles), 8)

    # VMEM estimate: double-buffered activation tiles, single-buffered resident
    # weights/biases, and ~6 live (TB, Dp) f32 intermediates inside the body.
    def est(tb_rows):
        return (3 * 2 * tb_rows * Dp * abytes
                + 2 * Dp * Dp * wbytes
                + 2 * Dp * 4
                + 6 * tb_rows * Dp * 4)

    cap = int(0.75 * vmem_cap)
    while est(TB) > cap and TB > 8:
        TB = _round_up(max(TB // 2, 8), 8)
    # TODO(synk): if the two resident (Dp, Dp) weights alone exceed the cap
    # (Dp >~ 3K bf16 on v7x), add a K-tiled weight path with f32 accumulators
    # instead of relying on a single resident block.

    Bp = _round_up(b8, TB)
    vmem_limit = int(min(max(int(1.3 * est(TB)), 16 << 20), cap))

    audio_p = _pad2(audio, Bp, Dp)
    mel_p = _pad2(mel, Bp, Dp)

    grid = (Bp // TB,)
    act_spec = pl.BlockSpec((TB, Dp), lambda i: (i, 0))
    # Constant index_map -> blocks are resident across the whole grid; a single
    # buffer is enough (double-buffering them only wastes VMEM).
    w_spec = pl.BlockSpec((Dp, Dp), lambda i: (0, 0),
                          pipeline_mode=pl.Buffered(buffer_count=1))
    b_spec = pl.BlockSpec((1, Dp), lambda i: (0, 0),
                          pipeline_mode=pl.Buffered(buffer_count=1))

    out_p = pl.pallas_call(
        _mma_kernel,
        out_shape=jax.ShapeDtypeStruct((Bp, Dp), audio.dtype),
        grid=grid,
        in_specs=[act_spec, act_spec, w_spec, b_spec, w_spec, b_spec],
        out_specs=act_spec,
        compiler_params=pltpu.CompilerParams(
            dimension_semantics=("parallel",),
            vmem_limit_bytes=vmem_limit,
        ),
    )(audio_p, mel_p, prepared["wq_t"], prepared["bq"],
      prepared["wk_t"], prepared["bk"])

    return out_p[:B, :D]


def _reference(audio, mel, params):
    q = audio @ params["wq"].T + params["bq"]
    k = mel @ params["wk"].T + params["bk"]
    attn = jax.nn.softmax(q * k, axis=1)
    return attn * audio + (1.0 - attn) * mel


if __name__ == "__main__":
    audio_dim = 4
    mel_dim = 4
    B = 8

    key = jax.random.PRNGKey(0)
    ks = jax.random.split(key, 8)

    # Deterministic parameter init (nn.Linear convention: W is (out, in)).
    # wv / bv mirror the module but are unused by the (dead-code) forward.
    params = {
        "wq": jax.random.normal(ks[0], (mel_dim, audio_dim), jnp.float32) * 0.5,
        "bq": jax.random.normal(ks[1], (mel_dim,), jnp.float32) * 0.1,
        "wk": jax.random.normal(ks[2], (mel_dim, mel_dim), jnp.float32) * 0.5,
        "bk": jax.random.normal(ks[3], (mel_dim,), jnp.float32) * 0.1,
        "wv": jax.random.normal(ks[4], (audio_dim, mel_dim), jnp.float32) * 0.5,
        "bv": jax.random.normal(ks[5], (audio_dim,), jnp.float32) * 0.1,
    }

    audio = jax.random.normal(ks[6], (B, audio_dim), jnp.float32)
    mel = jax.random.normal(ks[7], (B, mel_dim), jnp.float32)

    prepared = prepare_params(params, audio_dim, audio.dtype)

    out = multimodal_attention(audio, mel, prepared)
    out = jax.block_until_ready(out)

    ref = _reference(audio, mel, params)
    # Tolerance covers the approx (EUP) reciprocal in the softmax denominator.
    assert jnp.allclose(out, ref, atol=2e-3, rtol=2e-3), "mismatch vs reference"

    print("KERNEL_OK")
</pallas_src>

<mosaic_0001>
module attributes {stable_mosaic.version = 11 : i64} {
  func.func @_mma_kernel(%arg0: i32, %arg1: memref<8x128xf32, #tpu.memory_space<vmem>>, %arg2: memref<8x128xf32, #tpu.memory_space<vmem>>, %arg3: memref<128x128xf32, #tpu.memory_space<vmem>>, %arg4: memref<1x128xf32, #tpu.memory_space<vmem>>, %arg5: memref<128x128xf32, #tpu.memory_space<vmem>>, %arg6: memref<1x128xf32, #tpu.memory_space<vmem>>, %arg7: memref<8x128xf32, #tpu.memory_space<vmem>>) attributes {dimension_semantics = [#tpu.dimension_semantics<parallel>], iteration_bounds = array<i64: 1>, scalar_prefetch = 0 : i64, scratch_operands = 0 : i64, tpu.core_type = #tpu.core_type<tc>, window_params = [{transform_indices = @transform_0, window_bounds = array<i64: 8, 128>}, {transform_indices = @transform_1, window_bounds = array<i64: 8, 128>}, {pipeline_mode = #tpu.pipeline_mode<synchronous>, transform_indices = @transform_2, window_bounds = array<i64: 128, 128>}, {pipeline_mode = #tpu.pipeline_mode<synchronous>, transform_indices = @transform_3, window_bounds = array<i64: 1, 128>}, {pipeline_mode = #tpu.pipeline_mode<synchronous>, transform_indices = @transform_4, window_bounds = array<i64: 128, 128>}, {pipeline_mode = #tpu.pipeline_mode<synchronous>, transform_indices = @transform_5, window_bounds = array<i64: 1, 128>}, {transform_indices = @transform_6, window_bounds = array<i64: 8, 128>}]} {
    %c0 = arith.constant 0 : index
    %c0_0 = arith.constant 0 : index
    %0 = vector.load %arg1[%c0, %c0_0] : memref<8x128xf32, #tpu.memory_space<vmem>>, vector<8x128xf32>
    %c0_1 = arith.constant 0 : index
    %c0_2 = arith.constant 0 : index
    %1 = vector.load %arg2[%c0_1, %c0_2] : memref<8x128xf32, #tpu.memory_space<vmem>>, vector<8x128xf32>
    %c0_3 = arith.constant 0 : index
    %c0_4 = arith.constant 0 : index
    %2 = vector.load %arg3[%c0_3, %c0_4] : memref<128x128xf32, #tpu.memory_space<vmem>>, vector<128x128xf32>
    %cst = arith.constant dense<0.000000e+00> : vector<8x128xf32>
    %3 = tpu.matmul %0, %2, %cst {dimension_numbers = #tpu.dot_dimension_numbers<[1], [0], [0], [1], [0, 0, 1, 1], [], []>} : vector<8x128xf32>, vector<128x128xf32>, vector<8x128xf32> -> vector<8x128xf32>
    %c0_5 = arith.constant 0 : index
    %c0_6 = arith.constant 0 : index
    %4 = vector.load %arg4[%c0_5, %c0_6] : memref<1x128xf32, #tpu.memory_space<vmem>>, vector<1x128xf32>
    %5 = vector.broadcast %4 : vector<1x128xf32> to vector<8x128xf32>
    %6 = arith.addf %3, %5 : vector<8x128xf32>
    %c0_7 = arith.constant 0 : index
    %c0_8 = arith.constant 0 : index
    %7 = vector.load %arg5[%c0_7, %c0_8] : memref<128x128xf32, #tpu.memory_space<vmem>>, vector<128x128xf32>
    %cst_9 = arith.constant dense<0.000000e+00> : vector<8x128xf32>
    %8 = tpu.matmul %1, %7, %cst_9 {dimension_numbers = #tpu.dot_dimension_numbers<[1], [0], [0], [1], [0, 0, 1, 1], [], []>} : vector<8x128xf32>, vector<128x128xf32>, vector<8x128xf32> -> vector<8x128xf32>
    %c0_10 = arith.constant 0 : index
    %c0_11 = arith.constant 0 : index
    %9 = vector.load %arg6[%c0_10, %c0_11] : memref<1x128xf32, #tpu.memory_space<vmem>>, vector<1x128xf32>
    %10 = vector.broadcast %9 : vector<1x128xf32> to vector<8x128xf32>
    %11 = arith.addf %8, %10 : vector<8x128xf32>
    %12 = arith.mulf %6, %11 : vector<8x128xf32>
    %cst_12 = arith.constant dense<0xFF800000> : vector<8xf32>
    %13 = vector.multi_reduction <maximumf>, %12, %cst_12 [1] : vector<8x128xf32> to vector<8xf32>
    %14 = vector.shape_cast %13 : vector<8xf32> to vector<8x1xf32>
    %15 = vector.broadcast %14 : vector<8x1xf32> to vector<8x128xf32>
    %16 = arith.subf %12, %15 : vector<8x128xf32>
    %17 = math.exp %16 : vector<8x128xf32>
    %cst_13 = arith.constant dense<0.000000e+00> : vector<8xf32>
    %18 = vector.multi_reduction <add>, %17, %cst_13 [1] : vector<8x128xf32> to vector<8xf32>
    %19 = vector.shape_cast %18 : vector<8xf32> to vector<8x1xf32>
    %20 = tpu.reciprocal %19 {approx = true} : vector<8x1xf32> -> vector<8x1xf32>
    %21 = vector.broadcast %20 : vector<8x1xf32> to vector<8x128xf32>
    %22 = arith.mulf %17, %21 : vector<8x128xf32>
    %23 = arith.subf %0, %1 : vector<8x128xf32>
    %24 = arith.mulf %22, %23 : vector<8x128xf32>
    %25 = arith.addf %1, %24 : vector<8x128xf32>
    %c0_14 = arith.constant 0 : index
    %c0_15 = arith.constant 0 : index
    %26 = vector.load %arg7[%c0_14, %c0_15] : memref<8x128xf32, #tpu.memory_space<vmem>>, vector<8x128xf32>
    tpu.vector_store %arg7[%c0_14, %c0_15], %25 {strides = array<i32>} : memref<8x128xf32, #tpu.memory_space<vmem>>, vector<8x128xf32>,
    return
  }
  func.func @transform_0(%arg0: i32) -> (i32, i32) {
    %c0_i32 = arith.constant 0 : i32
    %c0_i32_0 = arith.constant 0 : i32
    return %arg0, %c0_i32 : i32, i32
  }
  func.func @transform_1(%arg0: i32) -> (i32, i32) {
    %c0_i32 = arith.constant 0 : i32
    %c0_i32_0 = arith.constant 0 : i32
    return %arg0, %c0_i32 : i32, i32
  }
  func.func @transform_2(%arg0: i32) -> (i32, i32) {
    %c0_i32 = arith.constant 0 : i32
    %c0_i32_0 = arith.constant 0 : i32
    %c0_i32_1 = arith.constant 0 : i32
    return %c0_i32, %c0_i32_0 : i32, i32
  }
  func.func @transform_3(%arg0: i32) -> (i32, i32) {
    %c0_i32 = arith.constant 0 : i32
    %c0_i32_0 = arith.constant 0 : i32
    %c0_i32_1 = arith.constant 0 : i32
    return %c0_i32, %c0_i32_0 : i32, i32
  }
  func.func @transform_4(%arg0: i32) -> (i32, i32) {
    %c0_i32 = arith.constant 0 : i32
    %c0_i32_0 = arith.constant 0 : i32
    %c0_i32_1 = arith.constant 0 : i32
    return %c0_i32, %c0_i32_0 : i32, i32
  }
  func.func @transform_5(%arg0: i32) -> (i32, i32) {
    %c0_i32 = arith.constant 0 : i32
    %c0_i32_0 = arith.constant 0 : i32
    %c0_i32_1 = arith.constant 0 : i32
    return %c0_i32, %c0_i32_0 : i32, i32
  }
  func.func @transform_6(%arg0: i32) -> (i32, i32) {
    %c0_i32 = arith.constant 0 : i32
    %c0_i32_0 = arith.constant 0 : i32
    return %arg0, %c0_i32 : i32, i32
  }
}

</mosaic_0001>

<llo_original>
// kernel: tpu_custom_call.1
$region0: #{tpu_custom_call.1}
  #allocation0 [shape = 'u32[]', space=smem, size = 0x4, offset = 0x4, fixed_abs, tag = 'smem constant byte address 0x4 - core index']
  #allocation1 [shape = 'u32[144,128]{1,0:T(1,128)}', space=vmem, size = 0x12000, scoped, tag = 'internal scratch']
  %s0 = inlined_call_operand.hbm [shape: f32[8,128], index: 0, kind: input, shape index: {}]
  %s1 = inlined_call_operand.hbm [shape: f32[8,128], index: 1, kind: input, shape index: {}]
  %s2 = inlined_call_operand.hbm [shape: f32[128,128], index: 2, kind: input, shape index: {}]
  %s3 = inlined_call_operand.vmem [shape: f32[1,128], index: 3, kind: input, shape index: {}]
  %s4 = inlined_call_operand.hbm [shape: f32[128,128], index: 4, kind: input, shape index: {}]
  %s5 = inlined_call_operand.vmem [shape: f32[1,128], index: 5, kind: input, shape index: {}]
  %s6 = inlined_call_operand.hbm [shape: f32[8,128], index: 6, kind: output, shape index: {}]
  %s7 = sld [smem:[#allocation0]]
  $region50: #{tpu_custom_call.1} parent=0
    _
  %s9 = ssub.s32 1, %s7
  %s10 = scalar_select 0, %s9, %s7
  $region1: #{tpu_custom_call.1} parent=0
    #allocation2 [shape = 'u8[4096]{0}', space=vmem, size = 0x1000, scoped, tag = 'input window, operand 0, single buffered']
    #allocation3 [shape = 's32[1]{0}', space=sflag, size = 0x4, scoped, tag = 'scoped memory for tpu_custom_call.1']
    #allocation4 [shape = 's32[1]{0}', space=sflag, size = 0x4, scoped, tag = 'scoped memory for tpu_custom_call.1']
    #allocation5 [shape = 'u8[4096]{0}', space=vmem, size = 0x1000, scoped, tag = 'input window, operand 1, single buffered']
    #allocation6 [shape = 's32[1]{0}', space=sflag, size = 0x4, scoped, tag = 'scoped memory for tpu_custom_call.1']
    #allocation7 [shape = 'u8[65536]{0}', space=vmem, size = 0x10000, scoped, tag = 'input window, operand 2, single buffered']
    #allocation8 [shape = 'u8[65536]{0}', space=vmem, size = 0x10000, scoped, tag = 'input window, operand 4, single buffered']
    #allocation9 [shape = 's32[1]{0}', space=sflag, size = 0x4, scoped, tag = 'scoped memory for tpu_custom_call.1']
    #allocation10 [shape = 'u8[4096]{0}', space=vmem, size = 0x1000, scoped, tag = 'output window, operand 0, single buffered']
    %11 = vsyncpa [#allocation3], 0
    %12 = vsyncpa [#allocation6], 0
    %13 = vsyncpa [#allocation9], 0
    %14 = vsyncpa [#allocation4], 0
    // Predicated region
    $region2: #{tpu_custom_call.1} parent=1 // pred_check
      _
    $region3: #{tpu_custom_call.1} parent=1 // pred_check_branch
      %16 = sbr.rel (0) target = $region5
    $region4: #{tpu_custom_call.1} parent=1 // pred_region
      %s18 = ssub.s32 128, 128
      %19 = vsyncadd [#allocation3], %s18
      %s21 = sshll.u32 [#allocation2], 4
      %s22 = int_to_ptr.vmem [resolvable:$true] %s21
      %24 = dma.hbm_to_vmem [thread:$0]  %s0, 128, %s22, [#allocation3]
    $region5: #{tpu_custom_call.1} parent=1 // pred_fallthru
      _
    // Predicated region
    $region6: #{tpu_custom_call.1} parent=1 // pred_check
      _
    $region7: #{tpu_custom_call.1} parent=1 // pred_check_branch
      %26 = sbr.rel (0) target = $region9
    $region8: #{tpu_custom_call.1} parent=1 // pred_region
      %s28 = ssub.s32 128, 128
      %29 = vsyncadd [#allocation6], %s28
      %s31 = sshll.u32 [#allocation5], 4
      %s32 = int_to_ptr.vmem [resolvable:$true] %s31
      %34 = dma.hbm_to_vmem [thread:$0]  %s1, 128, %s32, [#allocation6]
    $region9: #{tpu_custom_call.1} parent=1 // pred_fallthru
      _
    // Predicated region
    $region10: #{tpu_custom_call.1} parent=1 // pred_check
      _
    $region11: #{tpu_custom_call.1} parent=1 // pred_check_branch
      %36 = sbr.rel (0) target = $region13
    $region12: #{tpu_custom_call.1} parent=1 // pred_region
      %s38 = ssub.s32 2048, 2048
      %39 = vsyncadd [#allocation6], %s38
      %s40 = sshll.u32 [#allocation7], 4
      %s41 = int_to_ptr.vmem [resolvable:$true] %s40
      %46 = dma.hbm_to_vmem [thread:$0]  %s2, 2048, %s41, [#allocation6], 128, 128, 8
    $region13: #{tpu_custom_call.1} parent=1 // pred_fallthru
      _
    // Predicated region
    $region14: #{tpu_custom_call.1} parent=1 // pred_check
      _
    $region15: #{tpu_custom_call.1} parent=1 // pred_check_branch
      %48 = sbr.rel (0) target = $region17
    $region16: #{tpu_custom_call.1} parent=1 // pred_region
      _
    $region17: #{tpu_custom_call.1} parent=1 // pred_fallthru
      _
    // Predicated region
    $region18: #{tpu_custom_call.1} parent=1 // pred_check
      _
    $region19: #{tpu_custom_call.1} parent=1 // pred_check_branch
      %50 = sbr.rel (0) target = $region21
    $region20: #{tpu_custom_call.1} parent=1 // pred_region
      %s52 = ssub.s32 2048, 2048
      %53 = vsyncadd [#allocation9], %s52
      %s54 = sshll.u32 [#allocation8], 4
      %s55 = int_to_ptr.vmem [resolvable:$true] %s54
      %60 = dma.hbm_to_vmem [thread:$0]  %s4, 2048, %s55, [#allocation9], 128, 128, 8
    $region21: #{tpu_custom_call.1} parent=1 // pred_fallthru
      _
    // Predicated region
    $region22: #{tpu_custom_call.1} parent=1 // pred_check
      _
    $region23: #{tpu_custom_call.1} parent=1 // pred_check_branch
      %62 = sbr.rel (0) target = $region25
    $region24: #{tpu_custom_call.1} parent=1 // pred_region
      _
    $region25: #{tpu_custom_call.1} parent=1 // pred_fallthru
      _
    // Predicated region
    $region26: #{tpu_custom_call.1} parent=1 // pred_check
      _
    $region27: #{tpu_custom_call.1} parent=1 // pred_check_branch
      %64 = sbr.rel (0) target = $region29
    $region28: #{tpu_custom_call.1} parent=1 // pred_region
      %65 = dma.done [#allocation3], 128
    $region29: #{tpu_custom_call.1} parent=1 // pred_fallthru
      _
    // Predicated region
    $region30: #{tpu_custom_call.1} parent=1 // pred_check
      _
    $region31: #{tpu_custom_call.1} parent=1 // pred_check_branch
      %67 = sbr.rel (0) target = $region33
    $region32: #{tpu_custom_call.1} parent=1 // pred_region
      %68 = dma.done [#allocation6], 128
    $region33: #{tpu_custom_call.1} parent=1 // pred_fallthru
      _
    // Predicated region
    $region34: #{tpu_custom_call.1} parent=1 // pred_check
      _
    $region35: #{tpu_custom_call.1} parent=1 // pred_check_branch
      %70 = sbr.rel (0) target = $region37
    $region36: #{tpu_custom_call.1} parent=1 // pred_region
      %71 = dma.done [#allocation6], 2048
    $region37: #{tpu_custom_call.1} parent=1 // pred_fallthru
      _
    // Predicated region
    $region38: #{tpu_custom_call.1} parent=1 // pred_check
      _
    $region39: #{tpu_custom_call.1} parent=1 // pred_check_branch
      %73 = sbr.rel (0) target = $region41
    $region40: #{tpu_custom_call.1} parent=1 // pred_region
      %74 = dma.done [#allocation9], 2048
    $region41: #{tpu_custom_call.1} parent=1 // pred_fallthru
      _
    %v75 = vld [vmem:[#allocation2] sm:$0xff]
    %v76 = vld [vmem:[#allocation5] sm:$0xff]
    %v77 = vld [vmem:[#allocation7] sm:$0xff]
    %v78 = vld [vmem:[#allocation7 + $0x8] sm:$0xff]
    %v79 = vld [vmem:[#allocation7 + $0x10] sm:$0xff]
    %v80 = vld [vmem:[#allocation7 + $0x18] sm:$0xff]
    %v81 = vld [vmem:[#allocation7 + $0x20] sm:$0xff]
    %v82 = vld [vmem:[#allocation7 + $0x28] sm:$0xff]
    %v83 = vld [vmem:[#allocation7 + $0x30] sm:$0xff]
    %v84 = vld [vmem:[#allocation7 + $0x38] sm:$0xff]
    %v85 = vld [vmem:[#allocation7 + $0x40] sm:$0xff]
    %v86 = vld [vmem:[#allocation7 + $0x48] sm:$0xff]
    %v87 = vld [vmem:[#allocation7 + $0x50] sm:$0xff]
    %v88 = vld [vmem:[#allocation7 + $0x58] sm:$0xff]
    %v89 = vld [vmem:[#allocation7 + $0x60] sm:$0xff]
    %v90 = vld [vmem:[#allocation7 + $0x68] sm:$0xff]
    %v91 = vld [vmem:[#allocation7 + $0x70] sm:$0xff]
    %v92 = vld [vmem:[#allocation7 + $0x78] sm:$0xff]
    %v93 = vld [vmem:[%s3] sm:$0x1]
    %v95 = vlaneseq
    %v96 = vshrl.u32 %v95, 7
    %v97 = vsub.s32 0, %v96
    %v98 = vrot.slane %v93, %v97
    %100 = vmatprep.subr.mxu0 0.0
    %101 = vmatpush1.msra.mxu0 %v92
    %102 = vmatprep.subr.mxu0 0.0
    %103 = vmatpush1.msra.mxu0 %v91
    %104 = vmatprep.subr.mxu0 0.0
    %105 = vmatpush1.msra.mxu0 %v90
    %106 = vmatprep.subr.mxu0 0.0
    %107 = vmatpush1.msra.mxu0 %v89
    %108 = vmatprep.subr.mxu0 0.0
    %109 = vmatpush1.msra.mxu0 %v88
    %110 = vmatprep.subr.mxu0 0.0
    %111 = vmatpush1.msra.mxu0 %v87
    %112 = vmatprep.subr.mxu0 0.0
    %113 = vmatpush1.msra.mxu0 %v86
    %114 = vmatprep.subr.mxu0 0.0
    %115 = vmatpush1.msra.mxu0 %v85
    %116 = vmatprep.subr.mxu0 0.0
    %117 = vmatpush1.msra.mxu0 %v84
    %118 = vmatprep.subr.mxu0 0.0
    %119 = vmatpush1.msra.mxu0 %v83
    %120 = vmatprep.subr.mxu0 0.0
    %121 = vmatpush1.msra.mxu0 %v82
    %122 = vmatprep.subr.mxu0 0.0
    %123 = vmatpush1.msra.mxu0 %v81
    %124 = vmatprep.subr.mxu0 0.0
    %125 = vmatpush1.msra.mxu0 %v80
    %126 = vmatprep.subr.mxu0 0.0
    %127 = vmatpush1.msra.mxu0 %v79
    %128 = vmatprep.subr.mxu0 0.0
    %129 = vmatpush1.msra.mxu0 %v78
    %130 = vmatprep.subr.mxu0 0.0
    %131 = vmatpush1.msra.mxu0 %v77
    %132 = vmatprep.subr.mxu0 0.0
    %133 = vmatpush2.msra.mxu0 0.0
    %134 = vmatprep.subr.mxu0 0.0
    %135 = vmatpush2.msra.mxu0 0.0
    %136 = vmatprep.subr.mxu0 0.0
    %137 = vmatpush2.msra.mxu0 0.0
    %138 = vmatprep.subr.mxu0 0.0
    %139 = vmatpush2.msra.mxu0 0.0
    %140 = vmatprep.subr.mxu0 0.0
    %141 = vmatpush2.msra.mxu0 0.0
    %142 = vmatprep.subr.mxu0 0.0
    %143 = vmatpush2.msra.mxu0 0.0
    %144 = vmatprep.subr.mxu0 0.0
    %145 = vmatpush2.msra.mxu0 0.0
    %146 = vmatprep.subr.mxu0 0.0
    %147 = vmatpush2.msra.mxu0 0.0
    %148 = vmatprep.subr.mxu0 0.0
    %149 = vmatpush2.msra.mxu0 0.0
    %150 = vmatprep.subr.mxu0 0.0
    %151 = vmatpush2.msra.mxu0 0.0
    %152 = vmatprep.subr.mxu0 0.0
    %153 = vmatpush2.msra.mxu0 0.0
    %154 = vmatprep.subr.mxu0 0.0
    %155 = vmatpush2.msra.mxu0 0.0
    %156 = vmatprep.subr.mxu0 0.0
    %157 = vmatpush2.msra.mxu0 0.0
    %158 = vmatprep.subr.mxu0 0.0
    %159 = vmatpush2.msra.mxu0 0.0
    %160 = vmatprep.subr.mxu0 0.0
    %161 = vmatpush2.msra.mxu0 0.0
    %162 = vmatprep.subr.mxu0 0.0
    %163 = vmatpush2.msra.mxu0 0.0
    %164 = vmatprep.mubr.f32.mxu0 0.0
    %165 = vmatmul.mubr.f32.gmra.mxu0 %v75
    %v166 = vpop.f32.mrf.mxu0
    %v167 = vadd.f32 %v98, %v166
    %v168 = vpop.f32.mrf.mxu0
    %169 = vdwg.mxu0
    %v170 = vld [vmem:[#allocation8] sm:$0xff]
    %v171 = vld [vmem:[#allocation8 + $0x8] sm:$0xff]
    %v172 = vld [vmem:[#allocation8 + $0x10] sm:$0xff]
    %v173 = vld [vmem:[#allocation8 + $0x18] sm:$0xff]
    %v174 = vld [vmem:[#allocation8 + $0x20] sm:$0xff]
    %v175 = vld [vmem:[#allocation8 + $0x28] sm:$0xff]
    %v176 = vld [vmem:[#allocation8 + $0x30] sm:$0xff]
    %v177 = vld [vmem:[#allocation8 + $0x38] sm:$0xff]
    %v178 = vld [vmem:[#allocation8 + $0x40] sm:$0xff]
    %v179 = vld [vmem:[#allocation8 + $0x48] sm:$0xff]
    %v180 = vld [vmem:[#allocation8 + $0x50] sm:$0xff]
    %v181 = vld [vmem:[#allocation8 + $0x58] sm:$0xff]
    %v182 = vld [vmem:[#allocation8 + $0x60] sm:$0xff]
    %v183 = vld [vmem:[#allocation8 + $0x68] sm:$0xff]
    %v184 = vld [vmem:[#allocation8 + $0x70] sm:$0xff]
    %v185 = vld [vmem:[#allocation8 + $0x78] sm:$0xff]
    %v186 = vld [vmem:[%s5] sm:$0x1]
    %v188 = vlaneseq
    %v189 = vshrl.u32 %v188, 7
    %v190 = vsub.s32 0, %v189
    %v191 = vrot.slane %v186, %v190
    %193 = vmatprep.subr.mxu0 0.0
    %194 = vmatpush1.msra.mxu0 %v185
    %195 = vmatprep.subr.mxu0 0.0
    %196 = vmatpush1.msra.mxu0 %v184
    %197 = vmatprep.subr.mxu0 0.0
    %198 = vmatpush1.msra.mxu0 %v183
    %199 = vmatprep.subr.mxu0 0.0
    %200 = vmatpush1.msra.mxu0 %v182
    %201 = vmatprep.subr.mxu0 0.0
    %202 = vmatpush1.msra.mxu0 %v181
    %203 = vmatprep.subr.mxu0 0.0
    %204 = vmatpush1.msra.mxu0 %v180
    %205 = vmatprep.subr.mxu0 0.0
    %206 = vmatpush1.msra.mxu0 %v179
    %207 = vmatprep.subr.mxu0 0.0
    %208 = vmatpush1.msra.mxu0 %v178
    %209 = vmatprep.subr.mxu0 0.0
    %210 = vmatpush1.msra.mxu0 %v177
    %211 = vmatprep.subr.mxu0 0.0
    %212 = vmatpush1.msra.mxu0 %v176
    %213 = vmatprep.subr.mxu0 0.0
    %214 = vmatpush1.msra.mxu0 %v175
    %215 = vmatprep.subr.mxu0 0.0
    %216 = vmatpush1.msra.mxu0 %v174
    %217 = vmatprep.subr.mxu0 0.0
    %218 = vmatpush1.msra.mxu0 %v173
    %219 = vmatprep.subr.mxu0 0.0
    %220 = vmatpush1.msra.mxu0 %v172
    %221 = vmatprep.subr.mxu0 0.0
    %222 = vmatpush1.msra.mxu0 %v171
    %223 = vmatprep.subr.mxu0 0.0
    %224 = vmatpush1.msra.mxu0 %v170
    %225 = vmatprep.subr.mxu0 0.0
    %226 = vmatpush2.msra.mxu0 0.0
    %227 = vmatprep.subr.mxu0 0.0
    %228 = vmatpush2.msra.mxu0 0.0
    %229 = vmatprep.subr.mxu0 0.0
    %230 = vmatpush2.msra.mxu0 0.0
    %231 = vmatprep.subr.mxu0 0.0
    %232 = vmatpush2.msra.mxu0 0.0
    %233 = vmatprep.subr.mxu0 0.0
    %234 = vmatpush2.msra.mxu0 0.0
    %235 = vmatprep.subr.mxu0 0.0
    %236 = vmatpush2.msra.mxu0 0.0
    %237 = vmatprep.subr.mxu0 0.0
    %238 = vmatpush2.msra.mxu0 0.0
    %239 = vmatprep.subr.mxu0 0.0
    %240 = vmatpush2.msra.mxu0 0.0
    %241 = vmatprep.subr.mxu0 0.0
    %242 = vmatpush2.msra.mxu0 0.0
    %243 = vmatprep.subr.mxu0 0.0
    %244 = vmatpush2.msra.mxu0 0.0
    %245 = vmatprep.subr.mxu0 0.0
    %246 = vmatpush2.msra.mxu0 0.0
    %247 = vmatprep.subr.mxu0 0.0
    %248 = vmatpush2.msra.mxu0 0.0
    %249 = vmatprep.subr.mxu0 0.0
    %250 = vmatpush2.msra.mxu0 0.0
    %251 = vmatprep.subr.mxu0 0.0
    %252 = vmatpush2.msra.mxu0 0.0
    %253 = vmatprep.subr.mxu0 0.0
    %254 = vmatpush2.msra.mxu0 0.0
    %255 = vmatprep.subr.mxu0 0.0
    %256 = vmatpush2.msra.mxu0 0.0
    %257 = vmatprep.mubr.f32.mxu0 0.0
    %258 = vmatmul.mubr.f32.gmra.mxu0 %v76
    %v259 = vpop.f32.mrf.mxu0
    %v260 = vadd.f32 %v191, %v259
    %v261 = vpop.f32.mrf.mxu0
    %262 = vdwg.mxu0
    %v263 = vmul.f32 %v167, %v260
    %264 = vmax.xlane.f32.xlu0 %v263
    %v265 = vpop.xlane.xlu0 %264
    %v266 = vsub.f32 %v263, %v265
    %v267 = vmul.f32 %v266, 1.442695
    %v268 = vpow.pop %v267
    %269 = vadd.xlane.f32.xlu0 %v268
    %v270 = vpop.xlane.xlu0 %269
    %v271 = vrcp.pop %v270
    %v272 = vmul.f32 %v268, %v271
    %v273 = vsub.f32 %v75, %v76
    %v274 = vmul.f32 %v272, %v273
    %v275 = vadd.f32 %v76, %v274
    %276 = vst [vmem:[#allocation10] sm:$0xff] %v275
    // Predicated region
    $region42: #{tpu_custom_call.1} parent=1 // pred_check
      _
    $region43: #{tpu_custom_call.1} parent=1 // pred_check_branch
      %278 = sbr.rel (0) target = $region45
    $region44: #{tpu_custom_call.1} parent=1 // pred_region
      %s280 = ssub.s32 128, 128
      %281 = vsyncadd [#allocation4], %s280
      %s283 = sshll.u32 [#allocation10], 4
      %s284 = int_to_ptr.vmem [resolvable:$true] %s283
      %286 = dma.vmem_to_hbm [thread:$0]  %s284, 128, %s6, [#allocation4]
    $region45: #{tpu_custom_call.1} parent=1 // pred_fallthru
      _
    // Predicated region
    $region46: #{tpu_custom_call.1} parent=1 // pred_check
      _
    $region47: #{tpu_custom_call.1} parent=1 // pred_check_branch
      %288 = sbr.rel (0) target = $region49
    $region48: #{tpu_custom_call.1} parent=1 // pred_region
      %289 = dma.done [#allocation4], 128
    $region49: #{tpu_custom_call.1} parent=1 // pred_fallthru
      _
    %290 = vsyncpa [#allocation3], 1
    %291 = vsyncpa [#allocation6], 1
    %292 = vsyncpa [#allocation9], 1
    %293 = vsyncpa [#allocation4], 1

</llo_original>
